<compile_context>
chip_gen: v7x
topology: tpu7x:2x2x1
jax: 0.10.0
libtpu: 0.0.40
codegen_flags: <defaults>
</compile_context>

<pallas_src>
import functools

import jax
import jax.numpy as jnp
from jax.experimental import pallas as pl
from jax.experimental.pallas import tpu as pltpu


def _round_up(x: int, m: int) -> int:
    return (x + m - 1) // m * m


def _pick_row_tile(m: int, row_tile: int) -> int:
    """Row tile: multiple of 8, <= row_tile, grid >= 2 when possible, prefer TM | M."""
    target = min(row_tile, max(8, _round_up((m + 1) // 2, 8)))
    target = max(8, target)
    # Largest multiple-of-8 divisor of m that is <= target (no ragged tail).
    best_div = 0
    d = 8
    while d <= min(target, m):
        if m % d == 0:
            best_div = d
        d += 8
    if best_div >= max(8, target // 2):
        return best_div
    # No good divisor: use target; wrapper pads + slices the ragged tail.
    return target


def _spread_embed_kernel(tok_ref, w_ref, out_ref, mh_ref, *, vocab, action_dim):
    # tok_ref: [TM, A]        int32    token ids per (bs*seq) row
    # w_ref:   [3, A*V, A*E]  bfloat16 three exact bf16 planes of the folded table
    # out_ref: [TM, A*E]      out_dtype
    # mh_ref:  [TM, A*V]      bfloat16 scratch for the multi-hot matrix
    tm = out_ref.shape[0]
    A, V = action_dim, vocab

    tok = tok_ref[...]                                            # [TM, A]
    iota_v = jax.lax.broadcasted_iota(jnp.int32, (tm, V), 1)      # [TM, V]

    # Segmented one-hot build: compare each action's token only against its own
    # V-wide segment (A*V*TM VALU ops), placed at lane offset a*V in scratch.
    for a in range(A):
        mh_ref[:, a * V:(a + 1) * V] = (
            iota_v == tok[:, a:a + 1]).astype(jnp.bfloat16)

    multihot = mh_ref[...]                                        # [TM, A*V] bf16

    # Exact f32 gather via 3 bf16 planes, DEFAULT precision, f32 accumulate.
    acc = jnp.dot(multihot, w_ref[0], preferred_element_type=jnp.float32)
    acc = acc + jnp.dot(multihot, w_ref[1], preferred_element_type=jnp.float32)
    acc = acc + jnp.dot(multihot, w_ref[2], preferred_element_type=jnp.float32)
    out_ref[...] = acc.astype(out_ref.dtype)


def malt_pos_action_tokenized_spread_embedding(tokens, action_emb_w,
                                               action_pos_emb_w,
                                               *, row_tile=2048,
                                               out_dtype=jnp.float32):
    """tokens: int [bs, seq, A]; action_emb_w: [V, E]; action_pos_emb_w: [max_A, E]."""
    bs, seq, A = tokens.shape
    V, E = action_emb_w.shape

    # Fold positional embedding into a block-diagonal gather table (f32):
    #   W[a*V + v, b*E + e] = (a == b) * action_emb_w[v, e] * pos[a, e]
    pos = action_pos_emb_w[:A].astype(jnp.float32)                # [A, E]
    scaled = action_emb_w.astype(jnp.float32)[None, :, :] * pos[:, None, :]
    eye = jnp.eye(A, dtype=jnp.float32)                           # [A, A]
    w_folded = jnp.einsum("ave,ab->avbe", scaled, eye).reshape(A * V, A * E)

    # Exact 3-way bf16 split: W == W0 + W1 + W2 (to ~1 f32 ulp).
    w0 = w_folded.astype(jnp.bfloat16)
    r1 = w_folded - w0.astype(jnp.float32)
    w1 = r1.astype(jnp.bfloat16)
    r2 = r1 - w1.astype(jnp.float32)
    w2 = r2.astype(jnp.bfloat16)
    w_planes = jnp.stack([w0, w1, w2], axis=0)                    # [3, A*V, A*E]

    # Tile the (bs*seq) row axis.
    M = bs * seq
    TM = _pick_row_tile(M, row_tile)
    M_pad = _round_up(M, TM)

    tok2d = tokens.reshape(M, A).astype(jnp.int32)
    if M_pad != M:
        # TODO(synk): mask the ragged final tile instead of padding + the
        # post-kernel [:M] slice copy (only hit when no good tile divides M).
        tok2d = jnp.pad(tok2d, ((0, M_pad - M), (0, 0)))

    kernel = functools.partial(_spread_embed_kernel, vocab=V, action_dim=A)

    out_flat = pl.pallas_call(
        kernel,
        out_shape=jax.ShapeDtypeStruct((M_pad, A * E), out_dtype),
        grid=(M_pad // TM,),
        in_specs=[
            pl.BlockSpec((TM, A), lambda i: (i, 0)),              # streamed rows
            pl.BlockSpec((3, A * V, A * E), lambda i: (0, 0, 0)),  # resident table
        ],
        out_specs=pl.BlockSpec((TM, A * E), lambda i: (i, 0)),    # lane-dense stores
        scratch_shapes=[pltpu.VMEM((TM, A * V), jnp.bfloat16)],   # multihot scratch
        compiler_params=pltpu.CompilerParams(
            dimension_semantics=("parallel",)),                   # megacore-shardable
    )(tok2d, w_planes)

    if M_pad != M:
        out_flat = out_flat[:M]
    # [M, A*E] and [M, A, E] are the same row-major bytes -> free reshape.
    return out_flat.reshape(bs, seq, A, E)


def _reference(tokens, action_emb_w, action_pos_emb_w):
    A = tokens.shape[-1]
    emb = jnp.take(action_emb_w, tokens, axis=0)                  # [bs, seq, A, E]
    pos = action_pos_emb_w[:A]                                    # [A, E]
    return emb * pos[None, None, :, :]


if __name__ == "__main__":
    # Small shapes consistent with the module.
    bs, seq, action_dim = 2, 8, 4
    token_size, embedding_dim, max_num_actions = 32, 32, 100

    key = jax.random.PRNGKey(0)
    k_tok, k_emb, k_pos = jax.random.split(key, 3)

    # Deterministic parameter init (nn.Embedding default ~ N(0, 1)).
    action_emb_w = jax.random.normal(k_emb, (token_size, embedding_dim),
                                     dtype=jnp.float32)
    action_pos_emb_w = jax.random.normal(k_pos, (max_num_actions, embedding_dim),
                                         dtype=jnp.float32)
    tokens = jax.random.randint(k_tok, (bs, seq, action_dim), 0, token_size,
                                dtype=jnp.int32)

    out = malt_pos_action_tokenized_spread_embedding(
        tokens, action_emb_w, action_pos_emb_w)
    out = jax.block_until_ready(out)

    ref = _reference(tokens, action_emb_w, action_pos_emb_w)
    assert out.shape == (bs, seq, action_dim, embedding_dim)
    assert jnp.allclose(out, ref, atol=1e-5, rtol=1e-5), "mismatch vs reference"

    print("KERNEL_OK")
</pallas_src>

<mosaic_0001>
module attributes {stable_mosaic.version = 11 : i64} {
  func.func @_spread_embed_kernel(%arg0: i32, %arg1: memref<8x4xi32, #tpu.memory_space<vmem>>, %arg2: memref<3x128x128xbf16, #tpu.memory_space<vmem>>, %arg3: memref<8x128xf32, #tpu.memory_space<vmem>>, %arg4: memref<8x128xbf16, #tpu.memory_space<vmem>>) attributes {dimension_semantics = [#tpu.dimension_semantics<parallel>], iteration_bounds = array<i64: 2>, scalar_prefetch = 0 : i64, scratch_operands = 1 : i64, tpu.core_type = #tpu.core_type<tc>, window_params = [{transform_indices = @transform_0, window_bounds = array<i64: 8, 4>}, {pipeline_mode = #tpu.pipeline_mode<synchronous>, transform_indices = @transform_1, window_bounds = array<i64: 3, 128, 128>}, {transform_indices = @transform_2, window_bounds = array<i64: 8, 128>}]} {
    %c0 = arith.constant 0 : index
    %c0_0 = arith.constant 0 : index
    %0 = vector.load %arg1[%c0, %c0_0] : memref<8x4xi32, #tpu.memory_space<vmem>>, vector<8x4xi32>
    %1 = tpu.iota {dimensions = array<i32: 1>} : vector<8x32xi32>
    %2 = vector.extract_strided_slice %0 {offsets = [0, 0], sizes = [8, 1], strides = [1, 1]} : vector<8x4xi32> to vector<8x1xi32>
    %3 = vector.broadcast %2 : vector<8x1xi32> to vector<8x32xi32>
    %4 = arith.cmpi eq, %1, %3 : vector<8x32xi32>
    %5 = arith.extui %4 : vector<8x32xi1> to vector<8x32xi32>
    %6 = arith.sitofp %5 : vector<8x32xi32> to vector<8x32xf32>
    %7 = arith.truncf %6 : vector<8x32xf32> to vector<8x32xbf16>
    %c0_1 = arith.constant 0 : index
    %c0_2 = arith.constant 0 : index
    %8 = vector.load %arg4[%c0_1, %c0_2] : memref<8x128xbf16, #tpu.memory_space<vmem>>, vector<8x32xbf16>
    tpu.vector_store %arg4[%c0_1, %c0_2], %7 {strides = array<i32>} : memref<8x128xbf16, #tpu.memory_space<vmem>>, vector<8x32xbf16>,
    %9 = vector.extract_strided_slice %0 {offsets = [0, 1], sizes = [8, 1], strides = [1, 1]} : vector<8x4xi32> to vector<8x1xi32>
    %10 = vector.broadcast %9 : vector<8x1xi32> to vector<8x32xi32>
    %11 = arith.cmpi eq, %1, %10 : vector<8x32xi32>
    %12 = arith.extui %11 : vector<8x32xi1> to vector<8x32xi32>
    %13 = arith.sitofp %12 : vector<8x32xi32> to vector<8x32xf32>
    %14 = arith.truncf %13 : vector<8x32xf32> to vector<8x32xbf16>
    %c0_3 = arith.constant 0 : index
    %c32 = arith.constant 32 : index
    %15 = vector.load %arg4[%c0_3, %c32] : memref<8x128xbf16, #tpu.memory_space<vmem>>, vector<8x32xbf16>
    tpu.vector_store %arg4[%c0_3, %c32], %14 {strides = array<i32>} : memref<8x128xbf16, #tpu.memory_space<vmem>>, vector<8x32xbf16>,
    %16 = vector.extract_strided_slice %0 {offsets = [0, 2], sizes = [8, 1], strides = [1, 1]} : vector<8x4xi32> to vector<8x1xi32>
    %17 = vector.broadcast %16 : vector<8x1xi32> to vector<8x32xi32>
    %18 = arith.cmpi eq, %1, %17 : vector<8x32xi32>
    %19 = arith.extui %18 : vector<8x32xi1> to vector<8x32xi32>
    %20 = arith.sitofp %19 : vector<8x32xi32> to vector<8x32xf32>
    %21 = arith.truncf %20 : vector<8x32xf32> to vector<8x32xbf16>
    %c0_4 = arith.constant 0 : index
    %c64 = arith.constant 64 : index
    %22 = vector.load %arg4[%c0_4, %c64] : memref<8x128xbf16, #tpu.memory_space<vmem>>, vector<8x32xbf16>
    tpu.vector_store %arg4[%c0_4, %c64], %21 {strides = array<i32>} : memref<8x128xbf16, #tpu.memory_space<vmem>>, vector<8x32xbf16>,
    %23 = vector.extract_strided_slice %0 {offsets = [0, 3], sizes = [8, 1], strides = [1, 1]} : vector<8x4xi32> to vector<8x1xi32>
    %24 = vector.broadcast %23 : vector<8x1xi32> to vector<8x32xi32>
    %25 = arith.cmpi eq, %1, %24 : vector<8x32xi32>
    %26 = arith.extui %25 : vector<8x32xi1> to vector<8x32xi32>
    %27 = arith.sitofp %26 : vector<8x32xi32> to vector<8x32xf32>
    %28 = arith.truncf %27 : vector<8x32xf32> to vector<8x32xbf16>
    %c0_5 = arith.constant 0 : index
    %c96 = arith.constant 96 : index
    %29 = vector.load %arg4[%c0_5, %c96] : memref<8x128xbf16, #tpu.memory_space<vmem>>, vector<8x32xbf16>
    tpu.vector_store %arg4[%c0_5, %c96], %28 {strides = array<i32>} : memref<8x128xbf16, #tpu.memory_space<vmem>>, vector<8x32xbf16>,
    %c0_6 = arith.constant 0 : index
    %c0_7 = arith.constant 0 : index
    %30 = vector.load %arg4[%c0_6, %c0_7] : memref<8x128xbf16, #tpu.memory_space<vmem>>, vector<8x128xbf16>
    %c0_8 = arith.constant 0 : index
    %c0_9 = arith.constant 0 : index
    %c0_10 = arith.constant 0 : index
    %31 = vector.load %arg2[%c0_8, %c0_9, %c0_10] : memref<3x128x128xbf16, #tpu.memory_space<vmem>>, vector<1x128x128xbf16>
    %32 = vector.shape_cast %31 : vector<1x128x128xbf16> to vector<128x128xbf16>
    %cst = arith.constant dense<0.000000e+00> : vector<8x128xf32>
    %33 = tpu.matmul %30, %32, %cst {dimension_numbers = #tpu.dot_dimension_numbers<[1], [0], [0], [1], [0, 0, 1, 1], [], []>} : vector<8x128xbf16>, vector<128x128xbf16>, vector<8x128xf32> -> vector<8x128xf32>
    %c1 = arith.constant 1 : index
    %c0_11 = arith.constant 0 : index
    %c0_12 = arith.constant 0 : index
    %34 = vector.load %arg2[%c1, %c0_11, %c0_12] : memref<3x128x128xbf16, #tpu.memory_space<vmem>>, vector<1x128x128xbf16>
    %35 = vector.shape_cast %34 : vector<1x128x128xbf16> to vector<128x128xbf16>
    %cst_13 = arith.constant dense<0.000000e+00> : vector<8x128xf32>
    %36 = tpu.matmul %30, %35, %cst_13 {dimension_numbers = #tpu.dot_dimension_numbers<[1], [0], [0], [1], [0, 0, 1, 1], [], []>} : vector<8x128xbf16>, vector<128x128xbf16>, vector<8x128xf32> -> vector<8x128xf32>
    %37 = arith.addf %33, %36 : vector<8x128xf32>
    %c2 = arith.constant 2 : index
    %c0_14 = arith.constant 0 : index
    %c0_15 = arith.constant 0 : index
    %38 = vector.load %arg2[%c2, %c0_14, %c0_15] : memref<3x128x128xbf16, #tpu.memory_space<vmem>>, vector<1x128x128xbf16>
    %39 = vector.shape_cast %38 : vector<1x128x128xbf16> to vector<128x128xbf16>
    %cst_16 = arith.constant dense<0.000000e+00> : vector<8x128xf32>
    %40 = tpu.matmul %30, %39, %cst_16 {dimension_numbers = #tpu.dot_dimension_numbers<[1], [0], [0], [1], [0, 0, 1, 1], [], []>} : vector<8x128xbf16>, vector<128x128xbf16>, vector<8x128xf32> -> vector<8x128xf32>
    %41 = arith.addf %37, %40 : vector<8x128xf32>
    %c0_17 = arith.constant 0 : index
    %c0_18 = arith.constant 0 : index
    %42 = vector.load %arg3[%c0_17, %c0_18] : memref<8x128xf32, #tpu.memory_space<vmem>>, vector<8x128xf32>
    tpu.vector_store %arg3[%c0_17, %c0_18], %41 {strides = array<i32>} : memref<8x128xf32, #tpu.memory_space<vmem>>, vector<8x128xf32>,
    return
  }
  func.func @transform_0(%arg0: i32) -> (i32, i32) {
    %c0_i32 = arith.constant 0 : i32
    %c0_i32_0 = arith.constant 0 : i32
    return %arg0, %c0_i32 : i32, i32
  }
  func.func @transform_1(%arg0: i32) -> (i32, i32, i32) {
    %c0_i32 = arith.constant 0 : i32
    %c0_i32_0 = arith.constant 0 : i32
    %c0_i32_1 = arith.constant 0 : i32
    %c0_i32_2 = arith.constant 0 : i32
    return %c0_i32, %c0_i32_0, %c0_i32_1 : i32, i32, i32
  }
  func.func @transform_2(%arg0: i32) -> (i32, i32) {
    %c0_i32 = arith.constant 0 : i32
    %c0_i32_0 = arith.constant 0 : i32
    return %arg0, %c0_i32 : i32, i32
  }
}

</mosaic_0001>

<llo_original>
// kernel: tpu_custom_call.1
$region0: #{tpu_custom_call.1}
  #allocation0 [shape = 'u32[]', space=smem, size = 0x4, offset = 0x4, fixed_abs, tag = 'smem constant byte address 0x4 - core index']
  #allocation1 [shape = 'u32[144,128]{1,0:T(1,128)}', space=vmem, size = 0x12000, scoped, tag = 'internal scratch']
  #allocation2 [shape = 'bf16[8,128]{1,0:T(8,128)(2,1)}', space=vmem, size = 0x800, scoped, tag = 'scratch operand']
  %s0 = inlined_call_operand.vmem [shape: s32[16,4], index: 0, kind: input, shape index: {}]
  %s1 = inlined_call_operand.hbm [shape: bf16[3,128,128], index: 1, kind: input, shape index: {}]
  %s2 = inlined_call_operand.hbm [shape: f32[16,128], index: 2, kind: output, shape index: {}]
  %s3 = sld [smem:[#allocation0]]
  $region45: #{tpu_custom_call.1} parent=0
    _
  %s5 = ssub.s32 1, %s3
  %s6 = scalar_select 0, %s5, %s3
  $region1: #{tpu_custom_call.1} parent=0
    #allocation3 [shape = 'u8[98304]{0}', space=vmem, size = 0x18000, scoped, tag = 'input window, operand 1, single buffered']
    #allocation4 [shape = 's32[2]{0}', space=sflag, size = 0x8, scoped, tag = 'scoped memory for tpu_custom_call.1']
    #allocation5 [shape = 's32[2]{0}', space=sflag, size = 0x8, scoped, tag = 'scoped memory for tpu_custom_call.1']
    #allocation6 [shape = 'u8[8192]{0}', space=vmem, size = 0x2000, scoped, tag = 'output window, operand 0']
    %7 = vsyncpa [#allocation4], 0
    %8 = vsyncpa [#allocation5], 0
    %s9 = scalar_lea.sflag [#allocation5], 1
    %10 = vsyncpa %s9, 0
    loop: start=0, step=1, limit=4
    $region2: #{tpu_custom_call.1} parent=1 // loop_pre_header
      _
    $region3: #{tpu_custom_call.1} parent=1 // loop_header
      %s12 = sphi 0, %s16
      %p13 = scmp.ge.s32.totalorder %s12, 4
      %s22 = sphi 0, %s24
      %s25 = sphi 0, %s22
      %s26 = sphi 0, %s25
      %s42 = sphi 0, %s26
      %s46 = sphi 0, %s46
      %s48 = sphi 0, %s46
      %s49 = sphi 0, %s48
      %s63 = sphi 0, %s49
      %s69 = sphi 0, %s71
      %s72 = sphi 0, %s69
      %s73 = sphi 0, %s72
      %s89 = sphi 0, %s73
    $region4: #{tpu_custom_call.1} parent=1 // loop_header_branch
      %15 = sbr.rel (%p13) target = $region8
    $region5: #{tpu_custom_call.1} parent=1 // loop_body
      %s17 = ssub.s32 %s12, 1
      %s18 = ssub.s32 %s12, 2
      %s19 = sadd.s32 %s12, 1
      %s20 = ssub.s32 %s12, %s19
      %p21 = scmp.eq.s32.totalorder %s20, 0
      %s23 = sadd.s32 %s22, 1
      %s24 = scalar_select %p21, %s22, %s23
      %p27 = pneg %p21
      %p28 = scmp.eq.s32.totalorder %s12, 1
      %p29 = por %p27, %p28
      %p30 = scmp.ne.s32.totalorder %s22, %s25
      %p31 = scmp.eq.s32.totalorder %s12, 0
      %p32 = por %p30, %p31
      %p33 = scmp.ne.s32.totalorder %s22, %s25
      %p34 = scmp.eq.s32.totalorder %s17, 1
      %p35 = por %p33, %p34
      %p36 = scmp.ne.s32.totalorder %s25, %s26
      %p37 = scmp.eq.s32.totalorder %s17, 0
      %p38 = por %p36, %p37
      %p39 = scmp.ne.s32.totalorder %s25, %s26
      %p40 = scmp.eq.s32.totalorder %s18, 1
      %p41 = por %p39, %p40
      %p43 = scmp.ne.s32.totalorder %s26, %s42
      %p44 = scmp.eq.s32.totalorder %s18, 0
      %p45 = por %p43, %p44
      %s47 = sadd.s32 %s46, 1
      %p50 = scmp.eq.s32.totalorder %s12, 1
      %p51 = scmp.ne.s32.totalorder %s46, %s48
      %p52 = scmp.eq.s32.totalorder %s12, 0
      %p53 = por %p51, %p52
      %p54 = scmp.ne.s32.totalorder %s46, %s48
      %p55 = scmp.eq.s32.totalorder %s17, 1
      %p56 = por %p54, %p55
      %p57 = scmp.ne.s32.totalorder %s48, %s49
      %p58 = scmp.eq.s32.totalorder %s17, 0
      %p59 = por %p57, %p58
      %p60 = scmp.ne.s32.totalorder %s48, %s49
      %p61 = scmp.eq.s32.totalorder %s18, 1
      %p62 = por %p60, %p61
      %p64 = scmp.ne.s32.totalorder %s49, %s63
      %p65 = scmp.eq.s32.totalorder %s18, 0
      %p66 = por %p64, %p65
      %s67 = ssub.s32 %s12, %s19
      %p68 = scmp.eq.s32.totalorder %s67, 0
      %s70 = sadd.s32 %s69, 1
      %s71 = scalar_select %p68, %s69, %s70
      %p74 = pneg %p68
      %p75 = scmp.eq.s32.totalorder %s12, 1
      %p76 = por %p74, %p75
      %p77 = scmp.ne.s32.totalorder %s69, %s72
      %p78 = scmp.eq.s32.totalorder %s12, 0
      %p79 = por %p77, %p78
      %p80 = scmp.ne.s32.totalorder %s69, %s72
      %p81 = scmp.eq.s32.totalorder %s17, 1
      %p82 = por %p80, %p81
      %p83 = scmp.ne.s32.totalorder %s72, %s73
      %p84 = scmp.eq.s32.totalorder %s17, 0
      %p85 = por %p83, %p84
      %p86 = scmp.ne.s32.totalorder %s72, %s73
      %p87 = scmp.eq.s32.totalorder %s18, 1
      %p88 = por %p86, %p87
      %p90 = scmp.ne.s32.totalorder %s73, %s89
      %p91 = scmp.eq.s32.totalorder %s18, 0
      %p92 = por %p90, %p91
      %p93 = scmp.le.s32.totalorder 1, %s12
      %p94 = scmp.lt.s32.totalorder %s12, 3
      %p95 = pnand %p93, %p94
      %p96 = pneg %p95
      // Predicated region
      $region9: #{tpu_custom_call.1} parent=5 // pred_check
        _
      $region10: #{tpu_custom_call.1} parent=5 // pred_check_branch
        %98 = sbr.rel (%p95) target = $region12
      $region11: #{tpu_custom_call.1} parent=5 // pred_region
        %s99 = ssub.s32 %s12, 1
        // Predicated region
        $region13: #{tpu_custom_call.1} parent=11 // pred_check
          %p100 = pneg %p59
        $region14: #{tpu_custom_call.1} parent=11 // pred_check_branch
          %102 = sbr.rel (%p100) target = $region16
        $region15: #{tpu_custom_call.1} parent=11 // pred_region
          %s104 = ssub.s32 3072, 3072
          %105 = vsyncadd [#allocation4], %s104
          %s106 = sshll.u32 [#allocation3], 4
          %s107 = int_to_ptr.vmem [resolvable:$true] %s106
          %112 = dma.hbm_to_vmem [thread:$0]  %s1, 3072, %s107, [#allocation4], 64, 64, 4
        $region16: #{tpu_custom_call.1} parent=11 // pred_fallthru
          _
      $region12: #{tpu_custom_call.1} parent=5 // pred_fallthru
        _
      %p113 = scmp.lt.s32.totalorder %s12, 2
      // Predicated region
      $region17: #{tpu_custom_call.1} parent=5 // pred_check
        %p114 = pneg %p113
      $region18: #{tpu_custom_call.1} parent=5 // pred_check_branch
        %116 = sbr.rel (%p114) target = $region20
      $region19: #{tpu_custom_call.1} parent=5 // pred_region
        // Predicated region
        $region21: #{tpu_custom_call.1} parent=19 // pred_check
          %p117 = pneg %p32
        $region22: #{tpu_custom_call.1} parent=19 // pred_check_branch
          %119 = sbr.rel (%p117) target = $region24
        $region23: #{tpu_custom_call.1} parent=19 // pred_region
          %p120 = scmp.lt.s32.totalorder %s12, 1
          %s121 = scalar_select %p120, %s12, 1
          %s122 = smul.addr %s121, 8
          %s123 = scalar_lea.vmem %s0, %s122
        $region24: #{tpu_custom_call.1} parent=19 // pred_fallthru
          _
      $region20: #{tpu_custom_call.1} parent=5 // pred_fallthru
        _
      %p124 = scmp.le.s32.totalorder 1, %s12
      %p125 = scmp.lt.s32.totalorder %s12, 3
      %p126 = pnand %p124, %p125
      %p127 = pneg %p126
      // Predicated region
      $region25: #{tpu_custom_call.1} parent=5 // pred_check
        _
      $region26: #{tpu_custom_call.1} parent=5 // pred_check_branch
        %129 = sbr.rel (%p126) target = $region28
      $region27: #{tpu_custom_call.1} parent=5 // pred_region
        %s130 = ssub.s32 %s12, 1
        // Predicated region
        $region29: #{tpu_custom_call.1} parent=27 // pred_check
          %p131 = pneg %p59
        $region30: #{tpu_custom_call.1} parent=27 // pred_check_branch
          %133 = sbr.rel (%p131) target = $region32
        $region31: #{tpu_custom_call.1} parent=27 // pred_region
          %134 = dma.done [#allocation4], 3072
        $region32: #{tpu_custom_call.1} parent=27 // pred_fallthru
          _
        %p135 = scmp.lt.s32.totalorder %s17, 1
        %s136 = scalar_select %p135, %s17, 1
        %s137 = smul.addr %s136, 8
        %s138 = scalar_lea.vmem %s0, %s137
        %p139 = pneg %p38
        %p140 = pneg %p35
        %p141 = pneg %p59
        %p142 = pneg %p56
        %p143 = pneg %p85
        %p144 = pneg %p82
        %s145 = sand.u32 %s72, 1
        %s146 = scalar_lea.sflag [#allocation5], %s145
        %s147 = sand.u32 %s72, 1
        %s148 = smul.addr %s147, 8
        %s149 = scalar_lea.vmem [#allocation6], %s148
        %p150 = scmp.lt.s32.totalorder %s17, 1
        %s151 = scalar_select %p150, %s17, 1
        %s152 = smul.addr %s151, 8
        %s153 = scalar_lea.vmem %s0, %s152
        %v155 = vld [vmem:[%s153] sm:$0xff]
        %v156 = vlaneseq
        %v157 = vand.u32 %v156, 127
        %158 = vset.pattern.permute.xlu0 0
        %159 = vperm.xlu0 %158, %v155
        %v160 = vpop.permute.xlu0 %159
        %vm161 = vcmp.eq.s32.totalorder %v157, %v160
        %v162 = vsel %vm161, 1, 0
        %v163 = vcvt.s32.f32 %v162
        %v164 = vpack.c.bf16 %v163, %v163
        %vm165 = vcmask 257024
        %166 = vst.msk [vmem:[#allocation2] sm:$0xf] %vm165, %v164
        %167 = vset.pattern.permute.xlu0 1
        %168 = vperm.xlu0 %167, %v155
        %v169 = vpop.permute.xlu0 %168
        %vm170 = vcmp.eq.s32.totalorder %v157, %v169
        %v171 = vsel %vm170, 1, 0
        %v172 = vcvt.s32.f32 %v171
        %v173 = vpack.c.bf16 %v172, %v172
        %v175 = vunpack.c.l.b16 %v173
        %v176 = vpack.c.b16 %v175, %v175
        %177 = vrot.lane.b32.xlu0 %v176, 32
        %v178 = vpop.permute.xlu0 %177
        %vm180 = vcmask 519424
        %181 = vst.msk [vmem:[#allocation2] sm:$0xf] %vm180, %v178
        %182 = vset.pattern.permute.xlu0 2
        %183 = vperm.xlu0 %182, %v155
        %v184 = vpop.permute.xlu0 %183
        %vm185 = vcmp.eq.s32.totalorder %v157, %v184
        %v186 = vsel %vm185, 1, 0
        %v187 = vcvt.s32.f32 %v186
        %v188 = vpack.c.bf16 %v187, %v187
        %v190 = vunpack.c.l.b16 %v188
        %v191 = vpack.c.b16 %v190, %v190
        %192 = vrot.lane.b32.xlu0 %v191, 64
        %v193 = vpop.permute.xlu0 %192
        %vm195 = vcmask 781824
        %196 = vst.msk [vmem:[#allocation2] sm:$0xf] %vm195, %v193
        %197 = vset.pattern.permute.xlu0 3
        %198 = vperm.xlu0 %197, %v155
        %v199 = vpop.permute.xlu0 %198
        %vm200 = vcmp.eq.s32.totalorder %v157, %v199
        %v201 = vsel %vm200, 1, 0
        %v202 = vcvt.s32.f32 %v201
        %v203 = vpack.c.bf16 %v202, %v202
        %v205 = vunpack.c.l.b16 %v203
        %v206 = vpack.c.b16 %v205, %v205
        %207 = vrot.lane.b32.xlu0 %v206, 96
        %v208 = vpop.permute.xlu0 %207
        %vm210 = vcmask 1044224
        %211 = vst.msk [vmem:[#allocation2] sm:$0xf] %vm210, %v208
        %v212 = vld [vmem:[#allocation2] sm:$0xf]
        %v213 = vld [vmem:[#allocation3] sm:$0xf]
        %v214 = vld [vmem:[#allocation3 + $0x4] sm:$0xf]
        %v215 = vld [vmem:[#allocation3 + $0x8] sm:$0xf]
        %v216 = vld [vmem:[#allocation3 + $0xc] sm:$0xf]
        %v217 = vld [vmem:[#allocation3 + $0x10] sm:$0xf]
        %v218 = vld [vmem:[#allocation3 + $0x14] sm:$0xf]
        %v219 = vld [vmem:[#allocation3 + $0x18] sm:$0xf]
        %v220 = vld [vmem:[#allocation3 + $0x1c] sm:$0xf]
        %v221 = vld [vmem:[#allocation3 + $0x20] sm:$0xf]
        %v222 = vld [vmem:[#allocation3 + $0x24] sm:$0xf]
        %v223 = vld [vmem:[#allocation3 + $0x28] sm:$0xf]
        %v224 = vld [vmem:[#allocation3 + $0x2c] sm:$0xf]
        %v225 = vld [vmem:[#allocation3 + $0x30] sm:$0xf]
        %v226 = vld [vmem:[#allocation3 + $0x34] sm:$0xf]
        %v227 = vld [vmem:[#allocation3 + $0x38] sm:$0xf]
        %v228 = vld [vmem:[#allocation3 + $0x3c] sm:$0xf]
        %s229 = scalar_lea.vmem [#allocation3], 64
        %v230 = vld [vmem:[%s229] sm:$0xf]
        %v231 = vld [vmem:[%s229 + $0x4] sm:$0xf]
        %v232 = vld [vmem:[%s229 + $0x8] sm:$0xf]
        %v233 = vld [vmem:[%s229 + $0xc] sm:$0xf]
        %v234 = vld [vmem:[%s229 + $0x10] sm:$0xf]
        %v235 = vld [vmem:[%s229 + $0x14] sm:$0xf]
        %v236 = vld [vmem:[%s229 + $0x18] sm:$0xf]
        %v237 = vld [vmem:[%s229 + $0x1c] sm:$0xf]
        %v238 = vld [vmem:[%s229 + $0x20] sm:$0xf]
        %v239 = vld [vmem:[%s229 + $0x24] sm:$0xf]
        %v240 = vld [vmem:[%s229 + $0x28] sm:$0xf]
        %v241 = vld [vmem:[%s229 + $0x2c] sm:$0xf]
        %v242 = vld [vmem:[%s229 + $0x30] sm:$0xf]
        %v243 = vld [vmem:[%s229 + $0x34] sm:$0xf]
        %v244 = vld [vmem:[%s229 + $0x38] sm:$0xf]
        %v245 = vld [vmem:[%s229 + $0x3c] sm:$0xf]
        %v262 = vunpack.c.l.b16 %v230
        %v263 = vunpack.c.l.b16 %v231
        %v264 = vunpack.c.l.b16 %v232
        %v265 = vunpack.c.l.b16 %v233
        %v266 = vunpack.c.l.b16 %v234
        %v267 = vunpack.c.l.b16 %v235
        %v268 = vunpack.c.l.b16 %v236
        %v269 = vunpack.c.l.b16 %v237
        %v270 = vunpack.c.l.b16 %v238
        %v271 = vunpack.c.l.b16 %v239
        %v272 = vunpack.c.l.b16 %v240
        %v273 = vunpack.c.l.b16 %v241
        %v274 = vunpack.c.l.b16 %v242
        %v275 = vunpack.c.l.b16 %v243
        %v276 = vunpack.c.l.b16 %v244
        %v277 = vunpack.c.l.b16 %v245
        %v278 = vpack.c.b16 %v263, %v262
        %v279 = vpack.c.b16 %v265, %v264
        %v280 = vpack.c.b16 %v267, %v266
        %v281 = vpack.c.b16 %v269, %v268
        %v282 = vpack.c.b16 %v271, %v270
        %v283 = vpack.c.b16 %v273, %v272
        %v284 = vpack.c.b16 %v275, %v274
        %v285 = vpack.c.b16 %v277, %v276
        %294 = vmatprep.subr.bf16.mxu0 0
        %295 = vmatpush1.bf16.msra.mxu0 %v278
        %296 = vmatprep.subr.bf16.mxu0 0
        %297 = vmatpush1.bf16.msra.mxu0 %v279
        %298 = vmatprep.subr.bf16.mxu0 0
        %299 = vmatpush1.bf16.msra.mxu0 %v280
        %300 = vmatprep.subr.bf16.mxu0 0
        %301 = vmatpush1.bf16.msra.mxu0 %v281
        %302 = vmatprep.subr.bf16.mxu0 0
        %303 = vmatpush1.bf16.msra.mxu0 %v282
        %304 = vmatprep.subr.bf16.mxu0 0
        %305 = vmatpush1.bf16.msra.mxu0 %v283
        %306 = vmatprep.subr.bf16.mxu0 0
        %307 = vmatpush1.bf16.msra.mxu0 %v284
        %308 = vmatprep.subr.bf16.mxu0 0
        %309 = vmatpush1.bf16.msra.mxu0 %v285
        %310 = vmatprep.subr.bf16.mxu0 0
        %311 = vmatpush1.bf16.msra.mxu0 0
        %312 = vmatprep.subr.bf16.mxu0 0
        %313 = vmatpush1.bf16.msra.mxu0 0
        %314 = vmatprep.subr.bf16.mxu0 0
        %315 = vmatpush1.bf16.msra.mxu0 0
        %316 = vmatprep.subr.bf16.mxu0 0
        %317 = vmatpush1.bf16.msra.mxu0 0
        %318 = vmatprep.subr.bf16.mxu0 0
        %319 = vmatpush1.bf16.msra.mxu0 0
        %320 = vmatprep.subr.bf16.mxu0 0
        %321 = vmatpush1.bf16.msra.mxu0 0
        %322 = vmatprep.subr.bf16.mxu0 0
        %323 = vmatpush1.bf16.msra.mxu0 0
        %324 = vmatprep.subr.bf16.mxu0 0
        %325 = vmatpush1.bf16.msra.mxu0 0
        %326 = vmatprep.mubr.bf16.mxu0 0
        %327 = vmatmul.mubr.bf16.gmra.mrb[0].mxu0 %v212
        %v328 = vpop.f32.mrb[0].mxu0
        %v329 = vadd.f32 0.0, %v328
        %v330 = vpop.f32.mrb[0].mxu0
        %v331 = vpop.f32.mrb[0].mxu0
        %v332 = vpop.f32.mrb[0].mxu0
        %333 = vdwg.mxu0
        %v350 = vunpack.c.l.b16 %v213
        %v351 = vunpack.c.l.b16 %v214
        %v352 = vunpack.c.l.b16 %v215
        %v353 = vunpack.c.l.b16 %v216
        %v354 = vunpack.c.l.b16 %v217
        %v355 = vunpack.c.l.b16 %v218
        %v356 = vunpack.c.l.b16 %v219
        %v357 = vunpack.c.l.b16 %v220
        %v358 = vunpack.c.l.b16 %v221
        %v359 = vunpack.c.l.b16 %v222
        %v360 = vunpack.c.l.b16 %v223
        %v361 = vunpack.c.l.b16 %v224
        %v362 = vunpack.c.l.b16 %v225
        %v363 = vunpack.c.l.b16 %v226
        %v364 = vunpack.c.l.b16 %v227
        %v365 = vunpack.c.l.b16 %v228
        %v366 = vpack.c.b16 %v351, %v350
        %v367 = vpack.c.b16 %v353, %v352
        %v368 = vpack.c.b16 %v355, %v354
        %v369 = vpack.c.b16 %v357, %v356
        %v370 = vpack.c.b16 %v359, %v358
        %v371 = vpack.c.b16 %v361, %v360
        %v372 = vpack.c.b16 %v363, %v362
        %v373 = vpack.c.b16 %v365, %v364
        %382 = vmatprep.subr.bf16.mxu0 0
        %383 = vmatpush1.bf16.msra.mxu0 %v366
        %384 = vmatprep.subr.bf16.mxu0 0
        %385 = vmatpush1.bf16.msra.mxu0 %v367
        %386 = vmatprep.subr.bf16.mxu0 0
        %387 = vmatpush1.bf16.msra.mxu0 %v368
        %388 = vmatprep.subr.bf16.mxu0 0
        %389 = vmatpush1.bf16.msra.mxu0 %v369
        %390 = vmatprep.subr.bf16.mxu0 0
        %391 = vmatpush1.bf16.msra.mxu0 %v370
        %392 = vmatprep.subr.bf16.mxu0 0
        %393 = vmatpush1.bf16.msra.mxu0 %v371
        %394 = vmatprep.subr.bf16.mxu0 0
        %395 = vmatpush1.bf16.msra.mxu0 %v372
        %396 = vmatprep.subr.bf16.mxu0 0
        %397 = vmatpush1.bf16.msra.mxu0 %v373
        %398 = vmatprep.subr.bf16.mxu0 0
        %399 = vmatpush1.bf16.msra.mxu0 0
        %400 = vmatprep.subr.bf16.mxu0 0
        %401 = vmatpush1.bf16.msra.mxu0 0
        %402 = vmatprep.subr.bf16.mxu0 0
        %403 = vmatpush1.bf16.msra.mxu0 0
        %404 = vmatprep.subr.bf16.mxu0 0
        %405 = vmatpush1.bf16.msra.mxu0 0
        %406 = vmatprep.subr.bf16.mxu0 0
        %407 = vmatpush1.bf16.msra.mxu0 0
        %408 = vmatprep.subr.bf16.mxu0 0
        %409 = vmatpush1.bf16.msra.mxu0 0
        %410 = vmatprep.subr.bf16.mxu0 0
        %411 = vmatpush1.bf16.msra.mxu0 0
        %412 = vmatprep.subr.bf16.mxu0 0
        %413 = vmatpush1.bf16.msra.mxu0 0
        %414 = vmatprep.mubr.bf16.mxu0 0
        %415 = vmatmul.mubr.bf16.gmra.mrb[0].mxu0 %v212
        %v416 = vpop.f32.mrb[0].mxu0
        %v417 = vadd.f32 %v329, %v416
        %v418 = vpop.f32.mrb[0].mxu0
        %v419 = vpop.f32.mrb[0].mxu0
        %v420 = vpop.f32.mrb[0].mxu0
        %421 = vdwg.mxu0
        %s422 = scalar_lea.vmem [#allocation3], 128
        %v423 = vld [vmem:[%s422] sm:$0xf]
        %v424 = vld [vmem:[%s422 + $0x4] sm:$0xf]
        %v425 = vld [vmem:[%s422 + $0x8] sm:$0xf]
        %v426 = vld [vmem:[%s422 + $0xc] sm:$0xf]
        %v427 = vld [vmem:[%s422 + $0x10] sm:$0xf]
        %v428 = vld [vmem:[%s422 + $0x14] sm:$0xf]
        %v429 = vld [vmem:[%s422 + $0x18] sm:$0xf]
        %v430 = vld [vmem:[%s422 + $0x1c] sm:$0xf]
        %v431 = vld [vmem:[%s422 + $0x20] sm:$0xf]
        %v432 = vld [vmem:[%s422 + $0x24] sm:$0xf]
        %v433 = vld [vmem:[%s422 + $0x28] sm:$0xf]
        %v434 = vld [vmem:[%s422 + $0x2c] sm:$0xf]
        %v435 = vld [vmem:[%s422 + $0x30] sm:$0xf]
        %v436 = vld [vmem:[%s422 + $0x34] sm:$0xf]
        %v437 = vld [vmem:[%s422 + $0x38] sm:$0xf]
        %v438 = vld [vmem:[%s422 + $0x3c] sm:$0xf]
        %v455 = vunpack.c.l.b16 %v423
        %v456 = vunpack.c.l.b16 %v424
        %v457 = vunpack.c.l.b16 %v425
        %v458 = vunpack.c.l.b16 %v426
        %v459 = vunpack.c.l.b16 %v427
        %v460 = vunpack.c.l.b16 %v428
        %v461 = vunpack.c.l.b16 %v429
        %v462 = vunpack.c.l.b16 %v430
        %v463 = vunpack.c.l.b16 %v431
        %v464 = vunpack.c.l.b16 %v432
        %v465 = vunpack.c.l.b16 %v433
        %v466 = vunpack.c.l.b16 %v434
        %v467 = vunpack.c.l.b16 %v435
        %v468 = vunpack.c.l.b16 %v436
        %v469 = vunpack.c.l.b16 %v437
        %v470 = vunpack.c.l.b16 %v438
        %v471 = vpack.c.b16 %v456, %v455
        %v472 = vpack.c.b16 %v458, %v457
        %v473 = vpack.c.b16 %v460, %v459
        %v474 = vpack.c.b16 %v462, %v461
        %v475 = vpack.c.b16 %v464, %v463
        %v476 = vpack.c.b16 %v466, %v465
        %v477 = vpack.c.b16 %v468, %v467
        %v478 = vpack.c.b16 %v470, %v469
        %487 = vmatprep.subr.bf16.mxu0 0
        %488 = vmatpush1.bf16.msra.mxu0 %v471
        %489 = vmatprep.subr.bf16.mxu0 0
        %490 = vmatpush1.bf16.msra.mxu0 %v472
        %491 = vmatprep.subr.bf16.mxu0 0
        %492 = vmatpush1.bf16.msra.mxu0 %v473
        %493 = vmatprep.subr.bf16.mxu0 0
        %494 = vmatpush1.bf16.msra.mxu0 %v474
        %495 = vmatprep.subr.bf16.mxu0 0
        %496 = vmatpush1.bf16.msra.mxu0 %v475
        %497 = vmatprep.subr.bf16.mxu0 0
        %498 = vmatpush1.bf16.msra.mxu0 %v476
        %499 = vmatprep.subr.bf16.mxu0 0
        %500 = vmatpush1.bf16.msra.mxu0 %v477
        %501 = vmatprep.subr.bf16.mxu0 0
        %502 = vmatpush1.bf16.msra.mxu0 %v478
        %503 = vmatprep.subr.bf16.mxu0 0
        %504 = vmatpush1.bf16.msra.mxu0 0
        %505 = vmatprep.subr.bf16.mxu0 0
        %506 = vmatpush1.bf16.msra.mxu0 0
        %507 = vmatprep.subr.bf16.mxu0 0
        %508 = vmatpush1.bf16.msra.mxu0 0
        %509 = vmatprep.subr.bf16.mxu0 0
        %510 = vmatpush1.bf16.msra.mxu0 0
        %511 = vmatprep.subr.bf16.mxu0 0
        %512 = vmatpush1.bf16.msra.mxu0 0
        %513 = vmatprep.subr.bf16.mxu0 0
        %514 = vmatpush1.bf16.msra.mxu0 0
        %515 = vmatprep.subr.bf16.mxu0 0
        %516 = vmatpush1.bf16.msra.mxu0 0
        %517 = vmatprep.subr.bf16.mxu0 0
        %518 = vmatpush1.bf16.msra.mxu0 0
        %519 = vmatprep.mubr.bf16.mxu0 0
        %520 = vmatmul.mubr.bf16.gmra.mrb[0].mxu0 %v212
        %v521 = vpop.f32.mrb[0].mxu0
        %v522 = vadd.f32 0.0, %v521
        %v523 = vpop.f32.mrb[0].mxu0
        %v524 = vpop.f32.mrb[0].mxu0
        %v525 = vpop.f32.mrb[0].mxu0
        %526 = vdwg.mxu0
        %v527 = vadd.f32 %v417, %v522
        %528 = vst [vmem:[%s149] sm:$0xff] %v527
        %s529 = sand.u32 %s72, 1
        %s530 = scalar_lea.sflag [#allocation5], %s529
        %s531 = sand.u32 %s72, 1
        %s532 = smul.addr %s531, 8
        %s533 = scalar_lea.vmem [#allocation6], %s532
        // Predicated region
        $region33: #{tpu_custom_call.1} parent=27 // pred_check
          %p534 = pneg %p82
        $region34: #{tpu_custom_call.1} parent=27 // pred_check_branch
          %536 = sbr.rel (%p534) target = $region36
        $region35: #{tpu_custom_call.1} parent=27 // pred_region
          %s538 = ssub.s32 128, 128
          %539 = vsyncadd %s530, %s538
          %s540 = smul.addr %s17, 128
          %s541 = scalar_lea.hbm %s2, %s540
          %s543 = sshll.u32 %s533, 4
          %s544 = int_to_ptr.vmem [resolvable:$true] %s543
          %546 = dma.vmem_to_hbm [thread:$0]  %s544, 128, %s541, %s530
        $region36: #{tpu_custom_call.1} parent=27 // pred_fallthru
          _
      $region28: #{tpu_custom_call.1} parent=5 // pred_fallthru
        _
      %p547 = scmp.le.s32.totalorder 2, %s12
      // Predicated region
      $region37: #{tpu_custom_call.1} parent=5 // pred_check
        %p548 = pneg %p547
      $region38: #{tpu_custom_call.1} parent=5 // pred_check_branch
        %550 = sbr.rel (%p548) target = $region40
      $region39: #{tpu_custom_call.1} parent=5 // pred_region
        %s551 = ssub.s32 %s12, 2
        // Predicated region
        $region41: #{tpu_custom_call.1} parent=39 // pred_check
          %p552 = pneg %p88
        $region42: #{tpu_custom_call.1} parent=39 // pred_check_branch
          %554 = sbr.rel (%p552) target = $region44
        $region43: #{tpu_custom_call.1} parent=39 // pred_region
          %s555 = sand.u32 %s73, 1
          %s556 = scalar_lea.sflag [#allocation5], %s555
          %s557 = sand.u32 %s73, 1
          %s558 = smul.addr %s557, 8
          %s559 = scalar_lea.vmem [#allocation6], %s558
          %560 = dma.done %s556, 128
        $region44: #{tpu_custom_call.1} parent=39 // pred_fallthru
          _
      $region40: #{tpu_custom_call.1} parent=5 // pred_fallthru
        _
    $region6: #{tpu_custom_call.1} parent=1 // loop_footer
      %s16 = sadd.s32 1, %s12
    $region7: #{tpu_custom_call.1} parent=1 // loop_footer_branch
      %11 = sbr.rel target = $region3
    $region8: #{tpu_custom_call.1} parent=1 // loop_exit
      _
    %561 = vsyncpa [#allocation4], 1
    %s562 = scalar_lea.sflag [#allocation4], 1
    %563 = vsyncpa %s562, 1
    %564 = vsyncpa [#allocation5], 1
    %s565 = scalar_lea.sflag [#allocation5], 1
    %566 = vsyncpa %s565, 1

</llo_original>
